<compile_context>
chip_gen: v7x
topology: tpu7x:2x2x1
jax: 0.10.0
libtpu: 0.0.40
codegen_flags: <defaults>
</compile_context>

<pallas_src>
from functools import partial

import numpy as np
import jax
import jax.numpy as jnp
from jax import lax
from jax.experimental import pallas as pl
from jax.experimental.pallas import tpu as pltpu


# 48 MiB: leaves headroom on v7x (64 MiB physical per TC) while still raising the default
# scoped limit on v5e/v6e (128 MiB physical).
_VMEM_LIMIT = 48 * 1024 * 1024


# ---------------------------------------------------------------------------
# Kernel 1: fused QKV projection + RoPE (vectorized over all heads), head-packed
# (B, T, D) bf16 outputs with lane-dense (TS, D) stores.  The 1/sqrt(hd) softmax
# scale is folded into q here so kernel 2 never re-scales the score tile.
# ---------------------------------------------------------------------------
def _qkv_rope_kernel(x_ref, w_ref, cos_ref, sin_ref, q_ref, k_ref, v_ref, *,
                     n_heads, head_dim, scale):
    """x_ref: (1, TS, D) bf16; w_ref: (D, 3D) bf16 (q/k cols per-head [even|odd]);
    cos_ref/sin_ref: (TS, D) f32 (cos duplicated per half, sin carrying the sign);
    q/k/v_ref: (1, TS, D) bf16."""
    D = x_ref.shape[2]
    hd = head_dim
    half = hd // 2

    # bf16 x bf16 -> f32 accumulation on the MXU.
    qkv = jnp.dot(x_ref[0], w_ref[...], preferred_element_type=jnp.float32)  # (TS, 3D)

    cos = cos_ref[...]   # (TS, D) f32
    sin = sin_ref[...]   # (TS, D) f32, first half of each head carries -sin

    def rotate(t):
        # Per-head [even|odd] layout: swapped = per-head [odd|even]; then
        #   out = t * cos + swapped * sin   (full-width VPU ops, no per-head math).
        swapped = jnp.concatenate(
            [t[:, h * hd + off: h * hd + off + half]
             for h in range(n_heads) for off in (half, 0)],
            axis=-1)
        return t * cos + swapped * sin

    qs = qkv[:, :D]
    ks = qkv[:, D:2 * D]
    vs = qkv[:, 2 * D:]

    q_ref[0] = (rotate(qs) * scale).astype(q_ref.dtype)   # scale folded into q
    k_ref[0] = rotate(ks).astype(k_ref.dtype)
    v_ref[0] = vs.astype(v_ref.dtype)


# ---------------------------------------------------------------------------
# Kernel 2: flash attention.  Grid = (B, q-tiles); K/V of the batch stay resident in
# VMEM across all q-tiles (their index_map ignores the q-tile index, so Pallas only
# DMAs them when b changes).  The kv dimension is an in-kernel fori_loop whose trip
# count is the causal bound, split into an unmasked run (fully-past tiles) and a
# masked run (diagonal-crossing tiles); m/l/acc are loop carries (vregs, no scratch).
# ---------------------------------------------------------------------------
def _flash_attn_kernel(q_ref, k_ref, v_ref, o_ref, *, n_heads, head_dim, kv_chunk):
    """q_ref: (1, TQ, D) bf16 (pre-scaled); k_ref/v_ref: (1, T, D) bf16 (resident);
    o_ref: (1, TQ, D) bf16 head-packed."""
    qi = pl.program_id(1)
    tq = q_ref.shape[1]
    hd = head_dim
    tk = kv_chunk

    q_start = qi * tq
    n_unmasked = q_start // tk                       # kv chunks strictly below the diagonal
    n_total = (q_start + tq + tk - 1) // tk          # kv chunks touched under causality

    out_parts = []
    for h in range(n_heads):                         # static head loop: static lane slices
        c0, c1 = h * hd, (h + 1) * hd
        q = q_ref[0, :, c0:c1]                       # (TQ, hd) bf16

        def kv_step(i, carry, *, masked):
            m_prev, l_prev, acc_prev = carry
            start = pl.multiple_of(i * tk, tk)
            k_t = k_ref[0, pl.ds(start, tk), c0:c1]  # (tk, hd) bf16, resident VMEM
            v_t = v_ref[0, pl.ds(start, tk), c0:c1]  # (tk, hd) bf16
            s = lax.dot_general(q, k_t, (((1,), (1,)), ((), ())),
                                preferred_element_type=jnp.float32)   # (TQ, tk) f32
            if masked:
                # Only diagonal-crossing tiles pay for the iota mask (mask stays f32;
                # -1e30 would overflow to -inf if this path ever moved to bf16).
                row = q_start + lax.broadcasted_iota(jnp.int32, (tq, tk), 0)
                col = start + lax.broadcasted_iota(jnp.int32, (tq, tk), 1)
                s = jnp.where(col > row, jnp.float32(-1e30), s)
            m_new = jnp.maximum(m_prev, jnp.max(s, axis=-1, keepdims=True))
            alpha = jnp.exp(m_prev - m_new)
            p = jnp.exp(s - m_new)                   # f32 (kept f32 for v5e EUP compat)
            l_new = alpha * l_prev + jnp.sum(p, axis=-1, keepdims=True)
            acc_new = alpha * acc_prev + jnp.dot(p.astype(v_t.dtype), v_t,
                                                 preferred_element_type=jnp.float32)
            return (m_new, l_new, acc_new)

        init = (jnp.full((tq, 1), -jnp.inf, jnp.float32),
                jnp.zeros((tq, 1), jnp.float32),
                jnp.zeros((tq, hd), jnp.float32))
        carry = lax.fori_loop(0, n_unmasked, partial(kv_step, masked=False), init)
        m, l, acc = lax.fori_loop(n_unmasked, n_total, partial(kv_step, masked=True), carry)

        inv_l = pl.reciprocal(l, approx=True)        # EUP slot, not a VPU divide
        out_parts.append((acc * inv_l).astype(o_ref.dtype))

    # One lane-dense, head-packed (TQ, D) store.
    o_ref[0] = jnp.concatenate(out_parts, axis=-1)


# ---------------------------------------------------------------------------
# Kernel 3: output projection.  Attention output is already head-packed in D, so this
# is a pure load + one full-D MXU matmul + store (no repack loop, no scratch).
# ---------------------------------------------------------------------------
def _out_proj_kernel(attn_ref, wproj_ref, o_ref):
    """attn_ref: (1, TS, D) bf16; wproj_ref: (D, D) bf16; o_ref: (1, TS, D)."""
    out = jnp.dot(attn_ref[0], wproj_ref[...], preferred_element_type=jnp.float32)
    o_ref[0] = out.astype(o_ref.dtype)


def _rope_tables(head_dim, ctx_len, T, base=10000.0):
    """Exact reproduction of the PyTorch RotaryEmbedding buffers + the [..., ::2] indexing
    used by apply_rotary (including the cat((freqs, freqs)) quirk)."""
    inv_freq = 1.0 / (base ** (jnp.arange(0, head_dim, 2, dtype=jnp.float32) / head_dim))
    t = jnp.arange(ctx_len, dtype=jnp.float32)
    freqs = jnp.einsum('i,j->ij', t, inv_freq)                 # (ctx_len, hd/2)
    emb = jnp.concatenate([freqs, freqs], axis=-1)             # (ctx_len, hd)
    cos_half = jnp.cos(emb)[:T, ::2]                           # (T, hd/2)
    sin_half = jnp.sin(emb)[:T, ::2]
    return cos_half, sin_half


def _pick_tile(T, pref):
    for c in (pref, 512, 256, 128, 64, 32, 16, 8):
        if c <= T and T % c == 0:
            return c
    return T


def self_attention_forward(x, w_qkv, w_proj, *, n_heads, ctx_len, base=10000.0,
                           seq_tile=None, q_tile=None, kv_chunk=None):
    """x: (B, T, D); w_qkv: (3D, D) torch Linear layout; w_proj: (D, D) torch Linear layout."""
    B, T, D = x.shape
    H = n_heads
    assert D % H == 0
    hd = D // H
    assert hd % 2 == 0
    half = hd // 2

    TS = seq_tile if seq_tile is not None else _pick_tile(T, 512)   # projection seq tile
    TQ = q_tile if q_tile is not None else _pick_tile(T, 256)       # attention q tile
    TK = kv_chunk if kv_chunk is not None else _pick_tile(T, 256)   # in-kernel kv chunk
    assert T % TS == 0 and T % TQ == 0 and T % TK == 0

    scale = 1.0 / float(hd) ** 0.5

    # Full-width RoPE tables matched to the per-head [even|odd] column layout:
    # cos duplicated per half, sin carrying the sign (first half gets -sin).
    cos_half, sin_half = _rope_tables(hd, ctx_len, T, base)          # (T, hd/2)
    cos_full = jnp.tile(jnp.concatenate([cos_half, cos_half], axis=-1), (1, H))   # (T, D)
    sin_full = jnp.tile(jnp.concatenate([-sin_half, sin_half], axis=-1), (1, H))  # (T, D)

    # Pre-transpose Linear weights (y = x @ W.T); permute q/k columns per head to [even|odd].
    wqkv_t = jnp.asarray(w_qkv).T            # (D, 3D)
    wproj_t = jnp.asarray(w_proj).T          # (D, D)
    perm_within = np.concatenate([np.arange(0, hd, 2), np.arange(1, hd, 2)])
    head_perm = np.concatenate([h * hd + perm_within for h in range(H)])
    col_perm = np.concatenate([head_perm, D + head_perm, 2 * D + np.arange(D)])
    wqkv_t = wqkv_t[:, col_perm]

    # bf16 operands for every MXU matmul; accumulation stays f32 (preferred_element_type).
    x_bf = x.astype(jnp.bfloat16)
    wqkv_bf = wqkv_t.astype(jnp.bfloat16)
    wproj_bf = wproj_t.astype(jnp.bfloat16)

    cparams = pltpu.CompilerParams(
        dimension_semantics=("parallel", "parallel"),
        vmem_limit_bytes=_VMEM_LIMIT)

    # ---- Kernel 1: QKV projection + RoPE -> q/k/v head-packed (B, T, D) bf16 ----
    qkv_shape = jax.ShapeDtypeStruct((B, T, D), jnp.bfloat16)
    q, k, v = pl.pallas_call(
        partial(_qkv_rope_kernel, n_heads=H, head_dim=hd, scale=scale),
        out_shape=(qkv_shape, qkv_shape, qkv_shape),
        grid=(B, T // TS),
        in_specs=[
            pl.BlockSpec((1, TS, D), lambda b, s: (b, s, 0)),
            pl.BlockSpec((D, 3 * D), lambda b, s: (0, 0)),
            pl.BlockSpec((TS, D), lambda b, s: (s, 0)),
            pl.BlockSpec((TS, D), lambda b, s: (s, 0)),
        ],
        out_specs=(
            pl.BlockSpec((1, TS, D), lambda b, s: (b, s, 0)),
            pl.BlockSpec((1, TS, D), lambda b, s: (b, s, 0)),
            pl.BlockSpec((1, TS, D), lambda b, s: (b, s, 0)),
        ),
        compiler_params=cparams,
    )(x_bf, wqkv_bf, cos_full, sin_full)

    # ---- Kernel 2: flash attention; K/V resident per batch, in-kernel causal kv loop ----
    attn = pl.pallas_call(
        partial(_flash_attn_kernel, n_heads=H, head_dim=hd, kv_chunk=TK),
        out_shape=jax.ShapeDtypeStruct((B, T, D), jnp.bfloat16),
        grid=(B, T // TQ),
        in_specs=[
            pl.BlockSpec((1, TQ, D), lambda b, qi: (b, qi, 0)),
            pl.BlockSpec((1, T, D), lambda b, qi: (b, 0, 0)),   # K resident across q tiles
            pl.BlockSpec((1, T, D), lambda b, qi: (b, 0, 0)),   # V resident across q tiles
        ],
        out_specs=pl.BlockSpec((1, TQ, D), lambda b, qi: (b, qi, 0)),
        compiler_params=cparams,
    )(q, k, v)

    # ---- Kernel 3: output projection, one full-D matmul per sequence tile ----
    out = pl.pallas_call(
        _out_proj_kernel,
        out_shape=jax.ShapeDtypeStruct((B, T, D), x.dtype),
        grid=(B, T // TS),
        in_specs=[
            pl.BlockSpec((1, TS, D), lambda b, s: (b, s, 0)),
            pl.BlockSpec((D, D), lambda b, s: (0, 0)),
        ],
        out_specs=pl.BlockSpec((1, TS, D), lambda b, s: (b, s, 0)),
        compiler_params=cparams,
    )(attn, wproj_bf)
    return out


def _reference(x, w_qkv, w_proj, *, n_heads, ctx_len, base=10000.0):
    """Pure-JAX f32 reference mirroring the (intended) PyTorch forward."""
    B, T, D = x.shape
    hd = D // n_heads
    qkv = x @ w_qkv.T                                       # (B, T, 3D)
    qkv = qkv.reshape(B, T, 3, n_heads, hd)
    q, k, v = qkv[:, :, 0], qkv[:, :, 1], qkv[:, :, 2]      # (B, T, H, hd)
    q, k, v = (jnp.transpose(t, (0, 2, 1, 3)) for t in (q, k, v))   # (B, H, T, hd)

    inv_freq = 1.0 / (base ** (jnp.arange(0, hd, 2, dtype=jnp.float32) / hd))
    t_ = jnp.arange(ctx_len, dtype=jnp.float32)
    emb = jnp.concatenate([jnp.outer(t_, inv_freq)] * 2, axis=-1)
    sin, cos = jnp.sin(emb)[:T], jnp.cos(emb)[:T]           # (T, hd)

    def apply_rotary(t, sin, cos):
        te, to = t[..., ::2], t[..., 1::2]
        ce, se = cos[..., ::2], sin[..., ::2]
        re = te * ce - to * se
        ro = te * se + to * ce
        return jnp.stack([re, ro], axis=-1).reshape(t.shape)

    q = apply_rotary(q, sin, cos)
    k = apply_rotary(k, sin, cos)
    scores = jnp.einsum('bhqd,bhkd->bhqk', q, k) / jnp.sqrt(jnp.float32(hd))
    causal = jnp.triu(jnp.ones((T, T), dtype=bool), 1)
    scores = jnp.where(causal[None, None], -jnp.inf, scores)
    p = jax.nn.softmax(scores, axis=-1)
    o = jnp.einsum('bhqk,bhkd->bhqd', p, v)
    o = jnp.transpose(o, (0, 2, 1, 3)).reshape(B, T, D)
    return o @ w_proj.T


if __name__ == "__main__":
    B, T = 2, 16
    n_embed, n_heads, ctx_len = 32, 4, 16

    key = jax.random.PRNGKey(0)
    kx, kq, kp = jax.random.split(key, 3)
    x = jax.random.normal(kx, (B, T, n_embed), dtype=jnp.float32)
    w_qkv = jax.random.normal(kq, (3 * n_embed, n_embed), dtype=jnp.float32) * 0.02
    w_proj = jax.random.normal(kp, (n_embed, n_embed), dtype=jnp.float32) * 0.02

    # Small tiles so the multi-tile paths (unmasked kv loop, masked/diagonal kv loop,
    # multiple q tiles, multiple projection tiles) are actually exercised at toy shapes.
    out = self_attention_forward(x, w_qkv, w_proj, n_heads=n_heads, ctx_len=ctx_len,
                                 seq_tile=8, q_tile=8, kv_chunk=8)
    out = jax.block_until_ready(out)

    ref = _reference(x, w_qkv, w_proj, n_heads=n_heads, ctx_len=ctx_len)
    ref = jax.block_until_ready(ref)

    assert out.shape == (B, T, n_embed)
    np_out = np.asarray(out, dtype=np.float32)
    np_ref = np.asarray(ref, dtype=np.float32)
    assert np.isfinite(np_out).all()
    # bf16 MXU operands (+ approx reciprocal) vs f32 reference -> looser tolerance.
    assert np.allclose(np_out, np_ref, rtol=2e-2, atol=2e-3), \
        f"max abs diff {np.max(np.abs(np_out - np_ref))}"
    print("KERNEL_OK")
</pallas_src>

<mosaic_0001>
module attributes {stable_mosaic.version = 11 : i64} {
  func.func @_qkv_rope_kernel(%arg0: i32, %arg1: i32, %arg2: memref<1x8x32xbf16, #tpu.memory_space<vmem>>, %arg3: memref<32x96xbf16, #tpu.memory_space<vmem>>, %arg4: memref<8x32xf32, #tpu.memory_space<vmem>>, %arg5: memref<8x32xf32, #tpu.memory_space<vmem>>, %arg6: memref<1x8x32xbf16, #tpu.memory_space<vmem>>, %arg7: memref<1x8x32xbf16, #tpu.memory_space<vmem>>, %arg8: memref<1x8x32xbf16, #tpu.memory_space<vmem>>) attributes {dimension_semantics = [#tpu.dimension_semantics<parallel>, #tpu.dimension_semantics<parallel>], iteration_bounds = array<i64: 2, 2>, scalar_prefetch = 0 : i64, scratch_operands = 0 : i64, tpu.core_type = #tpu.core_type<tc>, window_params = [{transform_indices = @transform_0, window_bounds = array<i64: 1, 8, 32>}, {pipeline_mode = #tpu.pipeline_mode<synchronous>, transform_indices = @transform_1, window_bounds = array<i64: 32, 96>}, {transform_indices = @transform_2, window_bounds = array<i64: 8, 32>}, {transform_indices = @transform_3, window_bounds = array<i64: 8, 32>}, {transform_indices = @transform_4, window_bounds = array<i64: 1, 8, 32>}, {transform_indices = @transform_5, window_bounds = array<i64: 1, 8, 32>}, {transform_indices = @transform_6, window_bounds = array<i64: 1, 8, 32>}]} {
    %c0 = arith.constant 0 : index
    %c0_0 = arith.constant 0 : index
    %c0_1 = arith.constant 0 : index
    %0 = vector.load %arg2[%c0, %c0_0, %c0_1] : memref<1x8x32xbf16, #tpu.memory_space<vmem>>, vector<1x8x32xbf16>
    %1 = vector.shape_cast %0 : vector<1x8x32xbf16> to vector<8x32xbf16>
    %c0_2 = arith.constant 0 : index
    %c0_3 = arith.constant 0 : index
    %2 = vector.load %arg3[%c0_2, %c0_3] : memref<32x96xbf16, #tpu.memory_space<vmem>>, vector<32x96xbf16>
    %cst = arith.constant dense<0.000000e+00> : vector<8x96xf32>
    %3 = tpu.matmul %1, %2, %cst {dimension_numbers = #tpu.dot_dimension_numbers<[1], [0], [0], [1], [0, 0, 1, 1], [], []>} : vector<8x32xbf16>, vector<32x96xbf16>, vector<8x96xf32> -> vector<8x96xf32>
    %c0_4 = arith.constant 0 : index
    %c0_5 = arith.constant 0 : index
    %4 = vector.load %arg4[%c0_4, %c0_5] : memref<8x32xf32, #tpu.memory_space<vmem>>, vector<8x32xf32>
    %c0_6 = arith.constant 0 : index
    %c0_7 = arith.constant 0 : index
    %5 = vector.load %arg5[%c0_6, %c0_7] : memref<8x32xf32, #tpu.memory_space<vmem>>, vector<8x32xf32>
    %6 = vector.extract_strided_slice %3 {offsets = [0, 0], sizes = [8, 32], strides = [1, 1]} : vector<8x96xf32> to vector<8x32xf32>
    %7 = vector.extract_strided_slice %3 {offsets = [0, 32], sizes = [8, 32], strides = [1, 1]} : vector<8x96xf32> to vector<8x32xf32>
    %8 = vector.extract_strided_slice %3 {offsets = [0, 64], sizes = [8, 32], strides = [1, 1]} : vector<8x96xf32> to vector<8x32xf32>
    %9 = vector.extract_strided_slice %6 {offsets = [0, 4], sizes = [8, 4], strides = [1, 1]} : vector<8x32xf32> to vector<8x4xf32>
    %10 = vector.extract_strided_slice %6 {offsets = [0, 0], sizes = [8, 4], strides = [1, 1]} : vector<8x32xf32> to vector<8x4xf32>
    %11 = vector.extract_strided_slice %6 {offsets = [0, 12], sizes = [8, 4], strides = [1, 1]} : vector<8x32xf32> to vector<8x4xf32>
    %12 = vector.extract_strided_slice %6 {offsets = [0, 8], sizes = [8, 4], strides = [1, 1]} : vector<8x32xf32> to vector<8x4xf32>
    %13 = vector.extract_strided_slice %6 {offsets = [0, 20], sizes = [8, 4], strides = [1, 1]} : vector<8x32xf32> to vector<8x4xf32>
    %14 = vector.extract_strided_slice %6 {offsets = [0, 16], sizes = [8, 4], strides = [1, 1]} : vector<8x32xf32> to vector<8x4xf32>
    %15 = vector.extract_strided_slice %6 {offsets = [0, 28], sizes = [8, 4], strides = [1, 1]} : vector<8x32xf32> to vector<8x4xf32>
    %16 = vector.extract_strided_slice %6 {offsets = [0, 24], sizes = [8, 4], strides = [1, 1]} : vector<8x32xf32> to vector<8x4xf32>
    %17 = tpu.concatenate %9, %10, %11, %12, %13, %14, %15, %16 in 1 : vector<8x4xf32>, vector<8x4xf32>, vector<8x4xf32>, vector<8x4xf32>, vector<8x4xf32>, vector<8x4xf32>, vector<8x4xf32>, vector<8x4xf32> -> vector<8x32xf32>
    %18 = arith.mulf %6, %4 : vector<8x32xf32>
    %19 = arith.mulf %17, %5 : vector<8x32xf32>
    %20 = arith.addf %18, %19 : vector<8x32xf32>
    %cst_8 = arith.constant 0.353553385 : f32
    %21 = vector.broadcast %cst_8 : f32 to vector<8x32xf32>
    %22 = arith.mulf %20, %21 : vector<8x32xf32>
    %23 = arith.truncf %22 : vector<8x32xf32> to vector<8x32xbf16>
    %c0_9 = arith.constant 0 : index
    %c0_10 = arith.constant 0 : index
    %c0_11 = arith.constant 0 : index
    %24 = vector.load %arg6[%c0_9, %c0_10, %c0_11] : memref<1x8x32xbf16, #tpu.memory_space<vmem>>, vector<1x8x32xbf16>
    %25 = vector.shape_cast %24 : vector<1x8x32xbf16> to vector<8x32xbf16>
    %26 = vector.shape_cast %23 : vector<8x32xbf16> to vector<1x8x32xbf16>
    tpu.vector_store %arg6[%c0_9, %c0_10, %c0_11], %26 {strides = array<i32>} : memref<1x8x32xbf16, #tpu.memory_space<vmem>>, vector<1x8x32xbf16>,
    %27 = vector.extract_strided_slice %7 {offsets = [0, 4], sizes = [8, 4], strides = [1, 1]} : vector<8x32xf32> to vector<8x4xf32>
    %28 = vector.extract_strided_slice %7 {offsets = [0, 0], sizes = [8, 4], strides = [1, 1]} : vector<8x32xf32> to vector<8x4xf32>
    %29 = vector.extract_strided_slice %7 {offsets = [0, 12], sizes = [8, 4], strides = [1, 1]} : vector<8x32xf32> to vector<8x4xf32>
    %30 = vector.extract_strided_slice %7 {offsets = [0, 8], sizes = [8, 4], strides = [1, 1]} : vector<8x32xf32> to vector<8x4xf32>
    %31 = vector.extract_strided_slice %7 {offsets = [0, 20], sizes = [8, 4], strides = [1, 1]} : vector<8x32xf32> to vector<8x4xf32>
    %32 = vector.extract_strided_slice %7 {offsets = [0, 16], sizes = [8, 4], strides = [1, 1]} : vector<8x32xf32> to vector<8x4xf32>
    %33 = vector.extract_strided_slice %7 {offsets = [0, 28], sizes = [8, 4], strides = [1, 1]} : vector<8x32xf32> to vector<8x4xf32>
    %34 = vector.extract_strided_slice %7 {offsets = [0, 24], sizes = [8, 4], strides = [1, 1]} : vector<8x32xf32> to vector<8x4xf32>
    %35 = tpu.concatenate %27, %28, %29, %30, %31, %32, %33, %34 in 1 : vector<8x4xf32>, vector<8x4xf32>, vector<8x4xf32>, vector<8x4xf32>, vector<8x4xf32>, vector<8x4xf32>, vector<8x4xf32>, vector<8x4xf32> -> vector<8x32xf32>
    %36 = arith.mulf %7, %4 : vector<8x32xf32>
    %37 = arith.mulf %35, %5 : vector<8x32xf32>
    %38 = arith.addf %36, %37 : vector<8x32xf32>
    %39 = arith.truncf %38 : vector<8x32xf32> to vector<8x32xbf16>
    %c0_12 = arith.constant 0 : index
    %c0_13 = arith.constant 0 : index
    %c0_14 = arith.constant 0 : index
    %40 = vector.load %arg7[%c0_12, %c0_13, %c0_14] : memref<1x8x32xbf16, #tpu.memory_space<vmem>>, vector<1x8x32xbf16>
    %41 = vector.shape_cast %40 : vector<1x8x32xbf16> to vector<8x32xbf16>
    %42 = vector.shape_cast %39 : vector<8x32xbf16> to vector<1x8x32xbf16>
    tpu.vector_store %arg7[%c0_12, %c0_13, %c0_14], %42 {strides = array<i32>} : memref<1x8x32xbf16, #tpu.memory_space<vmem>>, vector<1x8x32xbf16>,
    %43 = arith.truncf %8 : vector<8x32xf32> to vector<8x32xbf16>
    %c0_15 = arith.constant 0 : index
    %c0_16 = arith.constant 0 : index
    %c0_17 = arith.constant 0 : index
    %44 = vector.load %arg8[%c0_15, %c0_16, %c0_17] : memref<1x8x32xbf16, #tpu.memory_space<vmem>>, vector<1x8x32xbf16>
    %45 = vector.shape_cast %44 : vector<1x8x32xbf16> to vector<8x32xbf16>
    %46 = vector.shape_cast %43 : vector<8x32xbf16> to vector<1x8x32xbf16>
    tpu.vector_store %arg8[%c0_15, %c0_16, %c0_17], %46 {strides = array<i32>} : memref<1x8x32xbf16, #tpu.memory_space<vmem>>, vector<1x8x32xbf16>,
    return
  }
  func.func @transform_0(%arg0: i32, %arg1: i32) -> (i32, i32, i32) {
    %c0_i32 = arith.constant 0 : i32
    %c0_i32_0 = arith.constant 0 : i32
    return %arg0, %arg1, %c0_i32 : i32, i32, i32
  }
  func.func @transform_1(%arg0: i32, %arg1: i32) -> (i32, i32) {
    %c0_i32 = arith.constant 0 : i32
    %c0_i32_0 = arith.constant 0 : i32
    %c0_i32_1 = arith.constant 0 : i32
    return %c0_i32, %c0_i32_0 : i32, i32
  }
  func.func @transform_2(%arg0: i32, %arg1: i32) -> (i32, i32) {
    %c0_i32 = arith.constant 0 : i32
    %c0_i32_0 = arith.constant 0 : i32
    return %arg1, %c0_i32 : i32, i32
  }
  func.func @transform_3(%arg0: i32, %arg1: i32) -> (i32, i32) {
    %c0_i32 = arith.constant 0 : i32
    %c0_i32_0 = arith.constant 0 : i32
    return %arg1, %c0_i32 : i32, i32
  }
  func.func @transform_4(%arg0: i32, %arg1: i32) -> (i32, i32, i32) {
    %c0_i32 = arith.constant 0 : i32
    %c0_i32_0 = arith.constant 0 : i32
    return %arg0, %arg1, %c0_i32 : i32, i32, i32
  }
  func.func @transform_5(%arg0: i32, %arg1: i32) -> (i32, i32, i32) {
    %c0_i32 = arith.constant 0 : i32
    %c0_i32_0 = arith.constant 0 : i32
    return %arg0, %arg1, %c0_i32 : i32, i32, i32
  }
  func.func @transform_6(%arg0: i32, %arg1: i32) -> (i32, i32, i32) {
    %c0_i32 = arith.constant 0 : i32
    %c0_i32_0 = arith.constant 0 : i32
    return %arg0, %arg1, %c0_i32 : i32, i32, i32
  }
}

</mosaic_0001>

<llo_original>
// kernel: tpu_custom_call.1
$region0: #{tpu_custom_call.1}
  #allocation0 [shape = 'u32[]', space=smem, size = 0x4, offset = 0x4, fixed_abs, tag = 'smem constant byte address 0x4 - core index']
  #allocation1 [shape = 'u32[144,128]{1,0:T(1,128)}', space=vmem, size = 0x12000, scoped, tag = 'internal scratch']
  %s0 = inlined_call_operand.hbm [shape: bf16[2,16,32], index: 0, kind: input, shape index: {}]
  %s1 = inlined_call_operand.hbm [shape: bf16[32,96], index: 1, kind: input, shape index: {}]
  %s2 = inlined_call_operand.hbm [shape: f32[16,32], index: 2, kind: input, shape index: {}]
  %s3 = inlined_call_operand.hbm [shape: f32[16,32], index: 3, kind: input, shape index: {}]
  %s4 = inlined_call_operand.hbm [shape: bf16[2,16,32], index: 4, kind: output, shape index: {0}]
  %s5 = inlined_call_operand.hbm [shape: bf16[2,16,32], index: 5, kind: output, shape index: {1}]
  %s6 = inlined_call_operand.hbm [shape: bf16[2,16,32], index: 6, kind: output, shape index: {2}]
  %7 = xla_tuple %s4, %s5, %s6
  %s8 = sld [smem:[#allocation0]]
  $region81: #{tpu_custom_call.1} parent=0
    _
  %s10 = ssub.s32 1, %s8
  %s11 = scalar_select 0, %s10, %s8
  $region1: #{tpu_custom_call.1} parent=0
    #allocation2 [shape = 'u8[4096]{0}', space=vmem, size = 0x1000, scoped, tag = 'input window, operand 0']
    #allocation3 [shape = 's32[2]{0}', space=sflag, size = 0x8, scoped, tag = 'scoped memory for tpu_custom_call.1']
    #allocation4 [shape = 's32[2]{0}', space=sflag, size = 0x8, scoped, tag = 'scoped memory for tpu_custom_call.1']
    #allocation5 [shape = 'u8[8192]{0}', space=vmem, size = 0x2000, scoped, tag = 'input window, operand 1, single buffered']
    #allocation6 [shape = 's32[1]{0}', space=sflag, size = 0x4, scoped, tag = 'scoped memory for tpu_custom_call.1']
    #allocation7 [shape = 'u8[8192]{0}', space=vmem, size = 0x2000, scoped, tag = 'input window, operand 2']
    #allocation8 [shape = 'u8[8192]{0}', space=vmem, size = 0x2000, scoped, tag = 'input window, operand 3']
    #allocation9 [shape = 'u8[4096]{0}', space=vmem, size = 0x1000, scoped, tag = 'output window, operand 0']
    #allocation10 [shape = 'u8[4096]{0}', space=vmem, size = 0x1000, scoped, tag = 'output window, operand 1']
    #allocation11 [shape = 's32[2]{0}', space=sflag, size = 0x8, scoped, tag = 'scoped memory for tpu_custom_call.1']
    #allocation12 [shape = 'u8[4096]{0}', space=vmem, size = 0x1000, scoped, tag = 'output window, operand 2']
    %12 = vsyncpa [#allocation3], 0
    %s13 = scalar_lea.sflag [#allocation3], 1
    %14 = vsyncpa %s13, 0
    %15 = vsyncpa [#allocation6], 0
    %16 = vsyncpa [#allocation4], 0
    %s17 = scalar_lea.sflag [#allocation4], 1
    %18 = vsyncpa %s17, 0
    %19 = vsyncpa [#allocation11], 0
    %s20 = scalar_lea.sflag [#allocation11], 1
    %21 = vsyncpa %s20, 0
    loop: start=0, step=1, limit=6
    $region2: #{tpu_custom_call.1} parent=1 // loop_pre_header
      _
    $region3: #{tpu_custom_call.1} parent=1 // loop_header
      %s23 = sphi 0, %s27
      %p24 = scmp.ge.s32.totalorder %s23, 6
      %s30 = sphi 0, %s42
      %s31 = sphi 0, %s38
      %s32 = sphi 0, %s30
      %s33 = sphi 0, %s31
      %s34 = sphi 0, %s32
      %s35 = sphi 0, %s33
      %s47 = sphi 0, %s49
      %s50 = sphi 0, %s47
      %s51 = sphi 0, %s50
      %s67 = sphi 0, %s51
      %s71 = sphi 0, %s71
      %s73 = sphi 0, %s71
      %s74 = sphi 0, %s73
      %s88 = sphi 0, %s74
      %s94 = sphi 0, %s96
      %s97 = sphi 0, %s94
      %s98 = sphi 0, %s97
      %s114 = sphi 0, %s98
      %s120 = sphi 0, %s122
      %s123 = sphi 0, %s120
      %s124 = sphi 0, %s123
      %s140 = sphi 0, %s124
      %s148 = sphi 0, %s150
      %s151 = sphi 0, %s148
      %s152 = sphi 0, %s151
      %s168 = sphi 0, %s152
      %s176 = sphi 0, %s178
      %s179 = sphi 0, %s176
      %s180 = sphi 0, %s179
      %s196 = sphi 0, %s180
      %s204 = sphi 0, %s206
      %s207 = sphi 0, %s204
      %s208 = sphi 0, %s207
      %s224 = sphi 0, %s208
    $region4: #{tpu_custom_call.1} parent=1 // loop_header_branch
      %26 = sbr.rel (%p24) target = $region8
    $region5: #{tpu_custom_call.1} parent=1 // loop_body
      %s28 = ssub.s32 %s23, 1
      %s29 = ssub.s32 %s23, 2
      %s36 = sadd.s32 1, %s31
      %p37 = scmp.ge.s32.totalorder %s36, 2
      %s38 = scalar_select %p37, 0, %s36
      %s39 = sadd.s32 1, %s30
      %s40 = scalar_select %p37, %s39, %s30
      %p41 = scmp.ge.s32.totalorder %s40, 2
      %s42 = scalar_select %p41, 0, %s40
      %s43 = ssub.s32 %s30, %s42
      %s44 = ssub.s32 %s31, %s38
      %s45 = sor.u32 %s43, %s44
      %p46 = scmp.eq.s32.totalorder %s45, 0
      %s48 = sadd.s32 %s47, 1
      %s49 = scalar_select %p46, %s47, %s48
      %p52 = pneg %p46
      %p53 = scmp.eq.s32.totalorder %s23, 3
      %p54 = por %p52, %p53
      %p55 = scmp.ne.s32.totalorder %s47, %s50
      %p56 = scmp.eq.s32.totalorder %s23, 0
      %p57 = por %p55, %p56
      %p58 = scmp.ne.s32.totalorder %s47, %s50
      %p59 = scmp.eq.s32.totalorder %s28, 3
      %p60 = por %p58, %p59
      %p61 = scmp.ne.s32.totalorder %s50, %s51
      %p62 = scmp.eq.s32.totalorder %s28, 0
      %p63 = por %p61, %p62
      %p64 = scmp.ne.s32.totalorder %s50, %s51
      %p65 = scmp.eq.s32.totalorder %s29, 3
      %p66 = por %p64, %p65
      %p68 = scmp.ne.s32.totalorder %s51, %s67
      %p69 = scmp.eq.s32.totalorder %s29, 0
      %p70 = por %p68, %p69
      %s72 = sadd.s32 %s71, 1
      %p75 = scmp.eq.s32.totalorder %s23, 3
      %p76 = scmp.ne.s32.totalorder %s71, %s73
      %p77 = scmp.eq.s32.totalorder %s23, 0
      %p78 = por %p76, %p77
      %p79 = scmp.ne.s32.totalorder %s71, %s73
      %p80 = scmp.eq.s32.totalorder %s28, 3
      %p81 = por %p79, %p80
      %p82 = scmp.ne.s32.totalorder %s73, %s74
      %p83 = scmp.eq.s32.totalorder %s28, 0
      %p84 = por %p82, %p83
      %p85 = scmp.ne.s32.totalorder %s73, %s74
      %p86 = scmp.eq.s32.totalorder %s29, 3
      %p87 = por %p85, %p86
      %p89 = scmp.ne.s32.totalorder %s74, %s88
      %p90 = scmp.eq.s32.totalorder %s29, 0
      %p91 = por %p89, %p90
      %s92 = ssub.s32 %s31, %s38
      %p93 = scmp.eq.s32.totalorder %s92, 0
      %s95 = sadd.s32 %s94, 1
      %s96 = scalar_select %p93, %s94, %s95
      %p99 = pneg %p93
      %p100 = scmp.eq.s32.totalorder %s23, 3
      %p101 = por %p99, %p100
      %p102 = scmp.ne.s32.totalorder %s94, %s97
      %p103 = scmp.eq.s32.totalorder %s23, 0
      %p104 = por %p102, %p103
      %p105 = scmp.ne.s32.totalorder %s94, %s97
      %p106 = scmp.eq.s32.totalorder %s28, 3
      %p107 = por %p105, %p106
      %p108 = scmp.ne.s32.totalorder %s97, %s98
      %p109 = scmp.eq.s32.totalorder %s28, 0
      %p110 = por %p108, %p109
      %p111 = scmp.ne.s32.totalorder %s97, %s98
      %p112 = scmp.eq.s32.totalorder %s29, 3
      %p113 = por %p111, %p112
      %p115 = scmp.ne.s32.totalorder %s98, %s114
      %p116 = scmp.eq.s32.totalorder %s29, 0
      %p117 = por %p115, %p116
      %s118 = ssub.s32 %s31, %s38
      %p119 = scmp.eq.s32.totalorder %s118, 0
      %s121 = sadd.s32 %s120, 1
      %s122 = scalar_select %p119, %s120, %s121
      %p125 = pneg %p119
      %p126 = scmp.eq.s32.totalorder %s23, 3
      %p127 = por %p125, %p126
      %p128 = scmp.ne.s32.totalorder %s120, %s123
      %p129 = scmp.eq.s32.totalorder %s23, 0
      %p130 = por %p128, %p129
      %p131 = scmp.ne.s32.totalorder %s120, %s123
      %p132 = scmp.eq.s32.totalorder %s28, 3
      %p133 = por %p131, %p132
      %p134 = scmp.ne.s32.totalorder %s123, %s124
      %p135 = scmp.eq.s32.totalorder %s28, 0
      %p136 = por %p134, %p135
      %p137 = scmp.ne.s32.totalorder %s123, %s124
      %p138 = scmp.eq.s32.totalorder %s29, 3
      %p139 = por %p137, %p138
      %p141 = scmp.ne.s32.totalorder %s124, %s140
      %p142 = scmp.eq.s32.totalorder %s29, 0
      %p143 = por %p141, %p142
      %s144 = ssub.s32 %s30, %s42
      %s145 = ssub.s32 %s31, %s38
      %s146 = sor.u32 %s144, %s145
      %p147 = scmp.eq.s32.totalorder %s146, 0
      %s149 = sadd.s32 %s148, 1
      %s150 = scalar_select %p147, %s148, %s149
      %p153 = pneg %p147
      %p154 = scmp.eq.s32.totalorder %s23, 3
      %p155 = por %p153, %p154
      %p156 = scmp.ne.s32.totalorder %s148, %s151
      %p157 = scmp.eq.s32.totalorder %s23, 0
      %p158 = por %p156, %p157
      %p159 = scmp.ne.s32.totalorder %s148, %s151
      %p160 = scmp.eq.s32.totalorder %s28, 3
      %p161 = por %p159, %p160
      %p162 = scmp.ne.s32.totalorder %s151, %s152
      %p163 = scmp.eq.s32.totalorder %s28, 0
      %p164 = por %p162, %p163
      %p165 = scmp.ne.s32.totalorder %s151, %s152
      %p166 = scmp.eq.s32.totalorder %s29, 3
      %p167 = por %p165, %p166
      %p169 = scmp.ne.s32.totalorder %s152, %s168
      %p170 = scmp.eq.s32.totalorder %s29, 0
      %p171 = por %p169, %p170
      %s172 = ssub.s32 %s30, %s42
      %s173 = ssub.s32 %s31, %s38
      %s174 = sor.u32 %s172, %s173
      %p175 = scmp.eq.s32.totalorder %s174, 0
      %s177 = sadd.s32 %s176, 1
      %s178 = scalar_select %p175, %s176, %s177
      %p181 = pneg %p175
      %p182 = scmp.eq.s32.totalorder %s23, 3
      %p183 = por %p181, %p182
      %p184 = scmp.ne.s32.totalorder %s176, %s179
      %p185 = scmp.eq.s32.totalorder %s23, 0
      %p186 = por %p184, %p185
      %p187 = scmp.ne.s32.totalorder %s176, %s179
      %p188 = scmp.eq.s32.totalorder %s28, 3
      %p189 = por %p187, %p188
      %p190 = scmp.ne.s32.totalorder %s179, %s180
      %p191 = scmp.eq.s32.totalorder %s28, 0
      %p192 = por %p190, %p191
      %p193 = scmp.ne.s32.totalorder %s179, %s180
      %p194 = scmp.eq.s32.totalorder %s29, 3
      %p195 = por %p193, %p194
      %p197 = scmp.ne.s32.totalorder %s180, %s196
      %p198 = scmp.eq.s32.totalorder %s29, 0
      %p199 = por %p197, %p198
      %s200 = ssub.s32 %s30, %s42
      %s201 = ssub.s32 %s31, %s38
      %s202 = sor.u32 %s200, %s201
      %p203 = scmp.eq.s32.totalorder %s202, 0
      %s205 = sadd.s32 %s204, 1
      %s206 = scalar_select %p203, %s204, %s205
      %p209 = pneg %p203
      %p210 = scmp.eq.s32.totalorder %s23, 3
      %p211 = por %p209, %p210
      %p212 = scmp.ne.s32.totalorder %s204, %s207
      %p213 = scmp.eq.s32.totalorder %s23, 0
      %p214 = por %p212, %p213
      %p215 = scmp.ne.s32.totalorder %s204, %s207
      %p216 = scmp.eq.s32.totalorder %s28, 3
      %p217 = por %p215, %p216
      %p218 = scmp.ne.s32.totalorder %s207, %s208
      %p219 = scmp.eq.s32.totalorder %s28, 0
      %p220 = por %p218, %p219
      %p221 = scmp.ne.s32.totalorder %s207, %s208
      %p222 = scmp.eq.s32.totalorder %s29, 3
      %p223 = por %p221, %p222
      %p225 = scmp.ne.s32.totalorder %s208, %s224
      %p226 = scmp.eq.s32.totalorder %s29, 0
      %p227 = por %p225, %p226
      %p228 = scmp.le.s32.totalorder 1, %s23
      %p229 = scmp.lt.s32.totalorder %s23, 5
      %p230 = pnand %p228, %p229
      %p231 = pneg %p230
      // Predicated region
      $region9: #{tpu_custom_call.1} parent=5 // pred_check
        _
      $region10: #{tpu_custom_call.1} parent=5 // pred_check_branch
        %233 = sbr.rel (%p230) target = $region12
      $region11: #{tpu_custom_call.1} parent=5 // pred_region
        %s234 = ssub.s32 %s23, 1
        // Predicated region
        $region13: #{tpu_custom_call.1} parent=11 // pred_check
          %p235 = pneg %p84
        $region14: #{tpu_custom_call.1} parent=11 // pred_check_branch
          %237 = sbr.rel (%p235) target = $region16
        $region15: #{tpu_custom_call.1} parent=11 // pred_region
          %s239 = ssub.s32 256, 256
          %240 = vsyncadd [#allocation6], %s239
          %s241 = sshll.u32 [#allocation5], 4
          %s242 = int_to_ptr.vmem [resolvable:$true] %s241
          %247 = dma.hbm_to_vmem [thread:$0]  %s1, 256, %s242, [#allocation6], 64, 64, 4
        $region16: #{tpu_custom_call.1} parent=11 // pred_fallthru
          _
      $region12: #{tpu_custom_call.1} parent=5 // pred_fallthru
        _
      %p248 = scmp.lt.s32.totalorder %s23, 4
      // Predicated region
      $region17: #{tpu_custom_call.1} parent=5 // pred_check
        %p249 = pneg %p248
      $region18: #{tpu_custom_call.1} parent=5 // pred_check_branch
        %251 = sbr.rel (%p249) target = $region20
      $region19: #{tpu_custom_call.1} parent=5 // pred_region
        // Predicated region
        $region21: #{tpu_custom_call.1} parent=19 // pred_check
          %p252 = pneg %p57
        $region22: #{tpu_custom_call.1} parent=19 // pred_check_branch
          %254 = sbr.rel (%p252) target = $region24
        $region23: #{tpu_custom_call.1} parent=19 // pred_region
          %s255 = sand.u32 %s23, 1
          %s256 = scalar_lea.sflag [#allocation3], %s255
          %s257 = sand.u32 %s47, 1
          %s258 = smul.addr %s257, 4
          %s259 = scalar_lea.vmem [#allocation2], %s258
          %s261 = ssub.s32 64, 64
          %262 = vsyncadd %s256, %s261
          %s263 = smul.addr %s30, 2
          %s264 = sadd.s32 %s31, %s263
          %s265 = smul.addr %s264, 64
          %s266 = scalar_lea.hbm %s0, %s265
          %s268 = sshll.u32 %s259, 4
          %s269 = int_to_ptr.vmem [resolvable:$true] %s268
          %271 = dma.hbm_to_vmem [thread:$0]  %s266, 64, %s269, %s256
        $region24: #{tpu_custom_call.1} parent=19 // pred_fallthru
          _
        // Predicated region
        $region25: #{tpu_custom_call.1} parent=19 // pred_check
          %p272 = pneg %p104
        $region26: #{tpu_custom_call.1} parent=19 // pred_check_branch
          %274 = sbr.rel (%p272) target = $region28
        $region27: #{tpu_custom_call.1} parent=19 // pred_region
          %s275 = sand.u32 %s23, 1
          %s276 = scalar_lea.sflag [#allocation3], %s275
          %s277 = sand.u32 %s94, 1
          %s278 = smul.addr %s277, 8
          %s279 = scalar_lea.vmem [#allocation7], %s278
          %s281 = ssub.s32 128, 128
          %282 = vsyncadd %s276, %s281
          %s283 = smul.addr %s31, 128
          %s284 = scalar_lea.hbm %s2, %s283
          %s286 = sshll.u32 %s279, 4
          %s287 = int_to_ptr.vmem [resolvable:$true] %s286
          %289 = dma.hbm_to_vmem [thread:$0]  %s284, 128, %s287, %s276
        $region28: #{tpu_custom_call.1} parent=19 // pred_fallthru
          _
        // Predicated region
        $region29: #{tpu_custom_call.1} parent=19 // pred_check
          %p290 = pneg %p130
        $region30: #{tpu_custom_call.1} parent=19 // pred_check_branch
          %292 = sbr.rel (%p290) target = $region32
        $region31: #{tpu_custom_call.1} parent=19 // pred_region
          %s293 = sand.u32 %s23, 1
          %s294 = scalar_lea.sflag [#allocation3], %s293
          %s295 = sand.u32 %s120, 1
          %s296 = smul.addr %s295, 8
          %s297 = scalar_lea.vmem [#allocation8], %s296
          %s299 = ssub.s32 128, 128
          %300 = vsyncadd %s294, %s299
          %s301 = smul.addr %s31, 128
          %s302 = scalar_lea.hbm %s3, %s301
          %s304 = sshll.u32 %s297, 4
          %s305 = int_to_ptr.vmem [resolvable:$true] %s304
          %307 = dma.hbm_to_vmem [thread:$0]  %s302, 128, %s305, %s294
        $region32: #{tpu_custom_call.1} parent=19 // pred_fallthru
          _
      $region20: #{tpu_custom_call.1} parent=5 // pred_fallthru
        _
      %p308 = scmp.le.s32.totalorder 1, %s23
      %p309 = scmp.lt.s32.totalorder %s23, 5
      %p310 = pnand %p308, %p309
      %p311 = pneg %p310
      // Predicated region
      $region33: #{tpu_custom_call.1} parent=5 // pred_check
        _
      $region34: #{tpu_custom_call.1} parent=5 // pred_check_branch
        %313 = sbr.rel (%p310) target = $region36
      $region35: #{tpu_custom_call.1} parent=5 // pred_region
        %s314 = ssub.s32 %s23, 1
        %s315 = sand.u32 %s28, 1
        %s316 = scalar_lea.sflag [#allocation3], %s315
        %s317 = sand.u32 %s50, 1
        %s318 = smul.addr %s317, 4
        %s319 = scalar_lea.vmem [#allocation2], %s318
        // Predicated region
        $region37: #{tpu_custom_call.1} parent=35 // pred_check
          %p320 = pneg %p63
        $region38: #{tpu_custom_call.1} parent=35 // pred_check_branch
          %322 = sbr.rel (%p320) target = $region40
        $region39: #{tpu_custom_call.1} parent=35 // pred_region
          %323 = dma.done %s316, 64
        $region40: #{tpu_custom_call.1} parent=35 // pred_fallthru
          _
        // Predicated region
        $region41: #{tpu_custom_call.1} parent=35 // pred_check
          %p324 = pneg %p84
        $region42: #{tpu_custom_call.1} parent=35 // pred_check_branch
          %326 = sbr.rel (%p324) target = $region44
        $region43: #{tpu_custom_call.1} parent=35 // pred_region
          %327 = dma.done [#allocation6], 256
        $region44: #{tpu_custom_call.1} parent=35 // pred_fallthru
          _
        %s328 = sand.u32 %s28, 1
        %s329 = scalar_lea.sflag [#allocation3], %s328
        %s330 = sand.u32 %s97, 1
        %s331 = smul.addr %s330, 8
        %s332 = scalar_lea.vmem [#allocation7], %s331
        // Predicated region
        $region45: #{tpu_custom_call.1} parent=35 // pred_check
          %p333 = pneg %p110
        $region46: #{tpu_custom_call.1} parent=35 // pred_check_branch
          %335 = sbr.rel (%p333) target = $region48
        $region47: #{tpu_custom_call.1} parent=35 // pred_region
          %336 = dma.done %s329, 128
        $region48: #{tpu_custom_call.1} parent=35 // pred_fallthru
          _
        %s337 = sand.u32 %s28, 1
        %s338 = scalar_lea.sflag [#allocation3], %s337
        %s339 = sand.u32 %s123, 1
        %s340 = smul.addr %s339, 8
        %s341 = scalar_lea.vmem [#allocation8], %s340
        // Predicated region
        $region49: #{tpu_custom_call.1} parent=35 // pred_check
          %p342 = pneg %p136
        $region50: #{tpu_custom_call.1} parent=35 // pred_check_branch
          %344 = sbr.rel (%p342) target = $region52
        $region51: #{tpu_custom_call.1} parent=35 // pred_region
          %345 = dma.done %s338, 128
        $region52: #{tpu_custom_call.1} parent=35 // pred_fallthru
          _
        %s346 = sand.u32 %s28, 1
        %s347 = scalar_lea.sflag [#allocation3], %s346
        %s348 = sand.u32 %s50, 1
        %s349 = smul.addr %s348, 4
        %s350 = scalar_lea.vmem [#allocation2], %s349
        %p351 = pneg %p63
        %p352 = pneg %p60
        %p353 = pneg %p84
        %p354 = pneg %p81
        %s355 = sand.u32 %s28, 1
        %s356 = scalar_lea.sflag [#allocation3], %s355
        %s357 = sand.u32 %s97, 1
        %s358 = smul.addr %s357, 8
        %s359 = scalar_lea.vmem [#allocation7], %s358
        %p360 = pneg %p110
        %p361 = pneg %p107
        %s362 = sand.u32 %s28, 1
        %s363 = scalar_lea.sflag [#allocation3], %s362
        %s364 = sand.u32 %s123, 1
        %s365 = smul.addr %s364, 8
        %s366 = scalar_lea.vmem [#allocation8], %s365
        %p367 = pneg %p136
        %p368 = pneg %p133
        %p369 = pneg %p164
        %p370 = pneg %p161
        %s371 = sand.u32 %s151, 1
        %s372 = scalar_lea.sflag [#allocation4], %s371
        %s373 = sand.u32 %s151, 1
        %s374 = smul.addr %s373, 4
        %s375 = scalar_lea.vmem [#allocation9], %s374
        %p376 = pneg %p192
        %p377 = pneg %p189
        %s378 = sand.u32 %s28, 1
        %s379 = scalar_lea.sflag [#allocation11], %s378
        %s380 = sand.u32 %s179, 1
        %s381 = smul.addr %s380, 4
        %s382 = scalar_lea.vmem [#allocation10], %s381
        %p383 = pneg %p220
        %p384 = pneg %p217
        %s385 = sand.u32 %s28, 1
        %s386 = scalar_lea.sflag [#allocation11], %s385
        %s387 = sand.u32 %s207, 1
        %s388 = smul.addr %s387, 4
        %s389 = scalar_lea.vmem [#allocation12], %s388
        %v391 = vld [vmem:[%s319] sm:$0xf]
        %v392 = vld [vmem:[#allocation5] sm:$0xf]
        %v393 = vld [vmem:[#allocation5 + $0x4] sm:$0xf]
        %v394 = vld [vmem:[#allocation5 + $0x8] sm:$0xf]
        %v395 = vld [vmem:[#allocation5 + $0xc] sm:$0xf]
        %v400 = vunpack.c.l.b16 %v392
        %v401 = vunpack.c.l.b16 %v393
        %v402 = vunpack.c.l.b16 %v394
        %v403 = vunpack.c.l.b16 %v395
        %v404 = vpack.c.b16 %v401, %v400
        %v405 = vpack.c.b16 %v403, %v402
        %vm408 = vcmask 261120
        %v410 = vsel %vm408, %v391, 0
        %412 = vmatprep.subr.bf16.mxu0 0
        %413 = vmatpush1.bf16.msra.mxu0 %v404
        %414 = vmatprep.subr.bf16.mxu0 0
        %415 = vmatpush1.bf16.msra.mxu0 %v405
        %416 = vmatprep.subr.bf16.mxu0 0
        %417 = vmatpush1.bf16.msra.mxu0 0
        %418 = vmatprep.subr.bf16.mxu0 0
        %419 = vmatpush1.bf16.msra.mxu0 0
        %420 = vmatprep.subr.bf16.mxu0 0
        %421 = vmatpush1.bf16.msra.mxu0 0
        %422 = vmatprep.subr.bf16.mxu0 0
        %423 = vmatpush1.bf16.msra.mxu0 0
        %424 = vmatprep.subr.bf16.mxu0 0
        %425 = vmatpush1.bf16.msra.mxu0 0
        %426 = vmatprep.subr.bf16.mxu0 0
        %427 = vmatpush1.bf16.msra.mxu0 0
        %428 = vmatprep.subr.bf16.mxu0 0
        %429 = vmatpush1.bf16.msra.mxu0 0
        %430 = vmatprep.subr.bf16.mxu0 0
        %431 = vmatpush1.bf16.msra.mxu0 0
        %432 = vmatprep.subr.bf16.mxu0 0
        %433 = vmatpush1.bf16.msra.mxu0 0
        %434 = vmatprep.subr.bf16.mxu0 0
        %435 = vmatpush1.bf16.msra.mxu0 0
        %436 = vmatprep.subr.bf16.mxu0 0
        %437 = vmatpush1.bf16.msra.mxu0 0
        %438 = vmatprep.subr.bf16.mxu0 0
        %439 = vmatpush1.bf16.msra.mxu0 0
        %440 = vmatprep.subr.bf16.mxu0 0
        %441 = vmatpush1.bf16.msra.mxu0 0
        %442 = vmatprep.subr.bf16.mxu0 0
        %443 = vmatpush1.bf16.msra.mxu0 0
        %444 = vmatprep.mubr.bf16.mxu0 0
        %445 = vmatmul.mubr.bf16.gmra.mrb[0].mxu0 %v410
        %v446 = vpop.f32.mrb[0].mxu0
        %v447 = vadd.f32 0.0, %v446
        %v448 = vpop.f32.mrb[0].mxu0
        %v449 = vpop.f32.mrb[0].mxu0
        %v450 = vpop.f32.mrb[0].mxu0
        %451 = vdwg.mxu0
        %v452 = vld [vmem:[%s332] sm:$0xff]
        %v453 = vld [vmem:[%s341] sm:$0xff]
        %455 = vrot.lane.b32.xlu0 %v447, 124
        %v456 = vpop.permute.xlu0 %455
        %458 = vrot.lane.b32.xlu0 %v447, 4
        %v459 = vpop.permute.xlu0 %458
        %vm461 = vcmask 31744
        %v462 = vsel %vm461, %v456, %v459
        %vm463 = vcmask 64512
        %v464 = vsel %vm463, %v462, %v456
        %vm465 = vcmask 97280
        %v466 = vsel %vm465, %v464, %v459
        %vm467 = vcmask 130048
        %v468 = vsel %vm467, %v466, %v456
        %vm469 = vcmask 162816
        %v470 = vsel %vm469, %v468, %v459
        %vm471 = vcmask 195584
        %v472 = vsel %vm471, %v470, %v456
        %vm473 = vcmask 228352
        %v474 = vsel %vm473, %v472, %v459
        %v475 = vmul.f32 %v447, %v452
        %v476 = vmul.f32 %v474, %v453
        %v477 = vadd.f32 %v475, %v476
        %v478 = vmul.f32 %v477, 0.35355338
        %v479 = vpack.c.bf16 %v478, %v478
        %vm480 = vcmask 257024
        %481 = vst.msk [vmem:[%s375] sm:$0xf] %vm480, %v479
        %482 = vrot.lane.b32.xlu0 %v447, 92
        %v483 = vpop.permute.xlu0 %482
        %485 = vrot.lane.b32.xlu0 %v447, 100
        %v486 = vpop.permute.xlu0 %485
        %v488 = vsel %vm461, %v483, %v486
        %v489 = vsel %vm463, %v488, %v483
        %v490 = vsel %vm465, %v489, %v486
        %v491 = vsel %vm467, %v490, %v483
        %v492 = vsel %vm469, %v491, %v486
        %v493 = vsel %vm471, %v492, %v483
        %v494 = vsel %vm473, %v493, %v486
        %496 = vrot.lane.b32.xlu0 %v452, 32
        %v497 = vpop.permute.xlu0 %496
        %v499 = vmul.f32 %v447, %v497
        %v500 = vmul.f32 %v494, %v453
        %502 = vrot.lane.b32.xlu0 %v500, 32
        %v503 = vpop.permute.xlu0 %502
        %v505 = vadd.f32 %v499, %v503
        %v506 = vpack.c.bf16 %v505, %v505
        %v508 = vunpack.c.l.b16 %v506
        %v509 = vpack.c.b16 %v508, %v508
        %510 = vrot.lane.b32.xlu0 %v509, 96
        %v511 = vpop.permute.xlu0 %510
        %513 = vst.msk [vmem:[%s382] sm:$0xf] %vm480, %v511
        %v514 = vpack.c.bf16 %v447, %v447
        %v516 = vunpack.c.l.b16 %v514
        %v517 = vpack.c.b16 %v516, %v516
        %518 = vrot.lane.b32.xlu0 %v517, 64
        %v519 = vpop.permute.xlu0 %518
        %521 = vst.msk [vmem:[%s389] sm:$0xf] %vm480, %v519
        %s522 = sand.u32 %s151, 1
        %s523 = scalar_lea.sflag [#allocation4], %s522
        %s524 = sand.u32 %s151, 1
        %s525 = smul.addr %s524, 4
        %s526 = scalar_lea.vmem [#allocation9], %s525
        %s527 = sand.u32 %s28, 1
        %s528 = scalar_lea.sflag [#allocation11], %s527
        %s529 = sand.u32 %s179, 1
        %s530 = smul.addr %s529, 4
        %s531 = scalar_lea.vmem [#allocation10], %s530
        %s532 = sand.u32 %s28, 1
        %s533 = scalar_lea.sflag [#allocation11], %s532
        %s534 = sand.u32 %s207, 1
        %s535 = smul.addr %s534, 4
        %s536 = scalar_lea.vmem [#allocation12], %s535
        // Predicated region
        $region53: #{tpu_custom_call.1} parent=35 // pred_check
          %p537 = pneg %p161
        $region54: #{tpu_custom_call.1} parent=35 // pred_check_branch
          %539 = sbr.rel (%p537) target = $region56
        $region55: #{tpu_custom_call.1} parent=35 // pred_region
          %s541 = ssub.s32 64, 64
          %542 = vsyncadd %s523, %s541
          %s543 = smul.addr %s32, 2
          %s544 = sadd.s32 %s33, %s543
          %s545 = smul.addr %s544, 64
          %s546 = scalar_lea.hbm %s4, %s545
          %s548 = sshll.u32 %s526, 4
          %s549 = int_to_ptr.vmem [resolvable:$true] %s548
          %551 = dma.vmem_to_hbm [thread:$0]  %s549, 64, %s546, %s523
        $region56: #{tpu_custom_call.1} parent=35 // pred_fallthru
          _
        // Predicated region
        $region57: #{tpu_custom_call.1} parent=35 // pred_check
          %p552 = pneg %p189
        $region58: #{tpu_custom_call.1} parent=35 // pred_check_branch
          %554 = sbr.rel (%p552) target = $region60
        $region59: #{tpu_custom_call.1} parent=35 // pred_region
          %s556 = ssub.s32 64, 64
          %557 = vsyncadd %s528, %s556
          %s558 = smul.addr %s32, 2
          %s559 = sadd.s32 %s33, %s558
          %s560 = smul.addr %s559, 64
          %s561 = scalar_lea.hbm %s5, %s560
          %s563 = sshll.u32 %s531, 4
          %s564 = int_to_ptr.vmem [resolvable:$true] %s563
          %566 = dma.vmem_to_hbm [thread:$0]  %s564, 64, %s561, %s528
        $region60: #{tpu_custom_call.1} parent=35 // pred_fallthru
          _
        // Predicated region
        $region61: #{tpu_custom_call.1} parent=35 // pred_check
          %p567 = pneg %p217
        $region62: #{tpu_custom_call.1} parent=35 // pred_check_branch
          %569 = sbr.rel (%p567) target = $region64
        $region63: #{tpu_custom_call.1} parent=35 // pred_region
          %s571 = ssub.s32 64, 64
          %572 = vsyncadd %s533, %s571
          %s573 = smul.addr %s32, 2
          %s574 = sadd.s32 %s33, %s573
          %s575 = smul.addr %s574, 64
          %s576 = scalar_lea.hbm %s6, %s575
          %s578 = sshll.u32 %s536, 4
          %s579 = int_to_ptr.vmem [resolvable:$true] %s578
          %581 = dma.vmem_to_hbm [thread:$0]  %s579, 64, %s576, %s533
        $region64: #{tpu_custom_call.1} parent=35 // pred_fallthru
          _
      $region36: #{tpu_custom_call.1} parent=5 // pred_fallthru
        _
      %p582 = scmp.le.s32.totalorder 2, %s23
      // Predicated region
      $region65: #{tpu_custom_call.1} parent=5 // pred_check
        %p583 = pneg %p582
      $region66: #{tpu_custom_call.1} parent=5 // pred_check_branch
        %585 = sbr.rel (%p583) target = $region68
      $region67: #{tpu_custom_call.1} parent=5 // pred_region
        %s586 = ssub.s32 %s23, 2
        // Predicated region
        $region69: #{tpu_custom_call.1} parent=67 // pred_check
          %p587 = pneg %p167
        $region70: #{tpu_custom_call.1} parent=67 // pred_check_branch
          %589 = sbr.rel (%p587) target = $region72
        $region71: #{tpu_custom_call.1} parent=67 // pred_region
          %s590 = sand.u32 %s152, 1
          %s591 = scalar_lea.sflag [#allocation4], %s590
          %s592 = sand.u32 %s152, 1
          %s593 = smul.addr %s592, 4
          %s594 = scalar_lea.vmem [#allocation9], %s593
          %595 = dma.done %s591, 64
        $region72: #{tpu_custom_call.1} parent=67 // pred_fallthru
          _
        // Predicated region
        $region73: #{tpu_custom_call.1} parent=67 // pred_check
          %p596 = pneg %p195
        $region74: #{tpu_custom_call.1} parent=67 // pred_check_branch
          %598 = sbr.rel (%p596) target = $region76
        $region75: #{tpu_custom_call.1} parent=67 // pred_region
          %s599 = sand.u32 %s29, 1
          %s600 = scalar_lea.sflag [#allocation11], %s599
          %s601 = sand.u32 %s180, 1
          %s602 = smul.addr %s601, 4
          %s603 = scalar_lea.vmem [#allocation10], %s602
          %604 = dma.done %s600, 64
        $region76: #{tpu_custom_call.1} parent=67 // pred_fallthru
          _
        // Predicated region
        $region77: #{tpu_custom_call.1} parent=67 // pred_check
          %p605 = pneg %p223
        $region78: #{tpu_custom_call.1} parent=67 // pred_check_branch
          %607 = sbr.rel (%p605) target = $region80
        $region79: #{tpu_custom_call.1} parent=67 // pred_region
          %s608 = sand.u32 %s29, 1
          %s609 = scalar_lea.sflag [#allocation11], %s608
          %s610 = sand.u32 %s208, 1
          %s611 = smul.addr %s610, 4
          %s612 = scalar_lea.vmem [#allocation12], %s611
          %613 = dma.done %s609, 64
        $region80: #{tpu_custom_call.1} parent=67 // pred_fallthru
          _
      $region68: #{tpu_custom_call.1} parent=5 // pred_fallthru
        _
    $region6: #{tpu_custom_call.1} parent=1 // loop_footer
      %s27 = sadd.s32 1, %s23
    $region7: #{tpu_custom_call.1} parent=1 // loop_footer_branch
      %22 = sbr.rel target = $region3
    $region8: #{tpu_custom_call.1} parent=1 // loop_exit
      _
    %614 = vsyncpa [#allocation3], 1
    %s615 = scalar_lea.sflag [#allocation3], 1
    %616 = vsyncpa %s615, 1
    %617 = vsyncpa [#allocation6], 1
    %618 = vsyncpa [#allocation4], 1
    %s619 = scalar_lea.sflag [#allocation4], 1
    %620 = vsyncpa %s619, 1
    %621 = vsyncpa [#allocation11], 1
    %s622 = scalar_lea.sflag [#allocation11], 1
    %623 = vsyncpa %s622, 1

</llo_original>
